<compile_context>
chip_gen: v7x
topology: tpu7x:2x2x1
jax: 0.10.0
libtpu: 0.0.40
codegen_flags: <defaults>
</compile_context>

<pallas_src>
import math
import jax
import jax.numpy as jnp
from jax.experimental import pallas as pl
from jax.experimental.pallas import tpu as pltpu


def _skip_linear_kernel(x_ref, w_ref, b_ref, o_ref):
    # x_ref: (TM, D) block of rows; w_ref: (D, D) in (in, out) layout; b_ref: (1, D).
    x = x_ref[...]
    y = jnp.dot(x, w_ref[...], preferred_element_type=jnp.float32)
    o_ref[...] = (x + y + b_ref[...]).astype(o_ref.dtype)


def _round_up(a, b):
    return (a + b - 1) // b * b


def skip_connection_linear(x, weight, bias, *, max_rows_per_step=256):
    """y = x + x @ weight.T + bias  (weight is PyTorch Linear layout (out, in))."""
    D = x.shape[-1]
    assert weight.shape == (D, D), "in_dim must equal out_dim in skip connection."
    lead = x.shape[:-1]

    x2d = x.reshape(-1, D)                      # contiguous flatten: no HBM copy
    M = x2d.shape[0]

    # Row-block size: fill the MXU (up to 256 rows / grid step), 8-sublane granule.
    m8 = _round_up(M, 8)
    tm = min(max_rows_per_step, m8)
    mp = _round_up(m8, tm)
    if mp != M:
        x2d = jnp.pad(x2d, ((0, mp - M), (0, 0)))

    w = weight.T                                # (in, out) so the kernel does x @ w
    b = bias.reshape(1, D)

    out = pl.pallas_call(
        _skip_linear_kernel,
        out_shape=jax.ShapeDtypeStruct((mp, D), x.dtype),
        grid=(mp // tm,),
        in_specs=[
            pl.BlockSpec((tm, D), lambda i: (i, 0)),   # streamed row blocks
            pl.BlockSpec((D, D), lambda i: (0, 0)),    # constant weight block
            pl.BlockSpec((1, D), lambda i: (0, 0)),    # constant bias block
        ],
        out_specs=pl.BlockSpec((tm, D), lambda i: (i, 0)),
        compiler_params=pltpu.CompilerParams(
            dimension_semantics=("parallel",)),        # megacore-shard the row blocks
    )(x2d, w, b)

    return out[:M].reshape(*lead, D)


if __name__ == "__main__":
    B, S, DIM = 2, 8, 128                       # batch=2, seq=8, hidden=128 (in==out)

    key = jax.random.PRNGKey(0)
    kx, kw, kb = jax.random.split(key, 3)
    x = jax.random.normal(kx, (B, S, DIM), jnp.float32)

    # nn.Linear default init: U(-1/sqrt(in_dim), 1/sqrt(in_dim)), W is (out, in).
    bound = 1.0 / math.sqrt(DIM)
    weight = jax.random.uniform(kw, (DIM, DIM), jnp.float32, -bound, bound)
    bias = jax.random.uniform(kb, (DIM,), jnp.float32, -bound, bound)

    y = skip_connection_linear(x, weight, bias)
    jax.block_until_ready(y)

    ref = x + jnp.einsum("bsd,od->bso", x, weight) + bias
    assert y.shape == x.shape
    assert bool(jnp.allclose(y, ref, rtol=1e-4, atol=1e-4))
    print("KERNEL_OK")
</pallas_src>

<mosaic_0001>
module attributes {stable_mosaic.version = 11 : i64} {
  func.func @_skip_linear_kernel(%arg0: i32, %arg1: memref<16x128xf32, #tpu.memory_space<vmem>>, %arg2: memref<128x128xf32, #tpu.memory_space<vmem>>, %arg3: memref<1x128xf32, #tpu.memory_space<vmem>>, %arg4: memref<16x128xf32, #tpu.memory_space<vmem>>) attributes {dimension_semantics = [#tpu.dimension_semantics<parallel>], iteration_bounds = array<i64: 1>, scalar_prefetch = 0 : i64, scratch_operands = 0 : i64, tpu.core_type = #tpu.core_type<tc>, window_params = [{transform_indices = @transform_0, window_bounds = array<i64: 16, 128>}, {pipeline_mode = #tpu.pipeline_mode<synchronous>, transform_indices = @transform_1, window_bounds = array<i64: 128, 128>}, {pipeline_mode = #tpu.pipeline_mode<synchronous>, transform_indices = @transform_2, window_bounds = array<i64: 1, 128>}, {transform_indices = @transform_3, window_bounds = array<i64: 16, 128>}]} {
    %c0 = arith.constant 0 : index
    %c0_0 = arith.constant 0 : index
    %0 = vector.load %arg1[%c0, %c0_0] : memref<16x128xf32, #tpu.memory_space<vmem>>, vector<16x128xf32>
    %c0_1 = arith.constant 0 : index
    %c0_2 = arith.constant 0 : index
    %1 = vector.load %arg2[%c0_1, %c0_2] : memref<128x128xf32, #tpu.memory_space<vmem>>, vector<128x128xf32>
    %cst = arith.constant dense<0.000000e+00> : vector<16x128xf32>
    %2 = tpu.matmul %0, %1, %cst {dimension_numbers = #tpu.dot_dimension_numbers<[1], [0], [0], [1], [0, 0, 1, 1], [], []>} : vector<16x128xf32>, vector<128x128xf32>, vector<16x128xf32> -> vector<16x128xf32>
    %3 = arith.addf %0, %2 : vector<16x128xf32>
    %c0_3 = arith.constant 0 : index
    %c0_4 = arith.constant 0 : index
    %4 = vector.load %arg3[%c0_3, %c0_4] : memref<1x128xf32, #tpu.memory_space<vmem>>, vector<1x128xf32>
    %5 = vector.broadcast %4 : vector<1x128xf32> to vector<16x128xf32>
    %6 = arith.addf %3, %5 : vector<16x128xf32>
    %c0_5 = arith.constant 0 : index
    %c0_6 = arith.constant 0 : index
    %7 = vector.load %arg4[%c0_5, %c0_6] : memref<16x128xf32, #tpu.memory_space<vmem>>, vector<16x128xf32>
    tpu.vector_store %arg4[%c0_5, %c0_6], %6 {strides = array<i32>} : memref<16x128xf32, #tpu.memory_space<vmem>>, vector<16x128xf32>,
    return
  }
  func.func @transform_0(%arg0: i32) -> (i32, i32) {
    %c0_i32 = arith.constant 0 : i32
    %c0_i32_0 = arith.constant 0 : i32
    return %arg0, %c0_i32 : i32, i32
  }
  func.func @transform_1(%arg0: i32) -> (i32, i32) {
    %c0_i32 = arith.constant 0 : i32
    %c0_i32_0 = arith.constant 0 : i32
    %c0_i32_1 = arith.constant 0 : i32
    return %c0_i32, %c0_i32_0 : i32, i32
  }
  func.func @transform_2(%arg0: i32) -> (i32, i32) {
    %c0_i32 = arith.constant 0 : i32
    %c0_i32_0 = arith.constant 0 : i32
    %c0_i32_1 = arith.constant 0 : i32
    return %c0_i32, %c0_i32_0 : i32, i32
  }
  func.func @transform_3(%arg0: i32) -> (i32, i32) {
    %c0_i32 = arith.constant 0 : i32
    %c0_i32_0 = arith.constant 0 : i32
    return %arg0, %c0_i32 : i32, i32
  }
}

</mosaic_0001>

<llo_original>
// kernel: tpu_custom_call.1
$region0: #{tpu_custom_call.1}
  #allocation0 [shape = 'u32[]', space=smem, size = 0x4, offset = 0x4, fixed_abs, tag = 'smem constant byte address 0x4 - core index']
  #allocation1 [shape = 'u32[144,128]{1,0:T(1,128)}', space=vmem, size = 0x12000, scoped, tag = 'internal scratch']
  %s0 = inlined_call_operand.hbm [shape: f32[16,128], index: 0, kind: input, shape index: {}]
  %s1 = inlined_call_operand.hbm [shape: f32[128,128], index: 1, kind: input, shape index: {}]
  %s2 = inlined_call_operand.vmem [shape: f32[1,128], index: 2, kind: input, shape index: {}]
  %s3 = inlined_call_operand.hbm [shape: f32[16,128], index: 3, kind: output, shape index: {}]
  %s4 = sld [smem:[#allocation0]]
  $region30: #{tpu_custom_call.1} parent=0
    _
  %s6 = ssub.s32 1, %s4
  %s7 = scalar_select 0, %s6, %s4
  $region1: #{tpu_custom_call.1} parent=0
    #allocation2 [shape = 'u8[8192]{0}', space=vmem, size = 0x2000, scoped, tag = 'input window, operand 0, single buffered']
    #allocation3 [shape = 's32[1]{0}', space=sflag, size = 0x4, scoped, tag = 'scoped memory for tpu_custom_call.1']
    #allocation4 [shape = 's32[1]{0}', space=sflag, size = 0x4, scoped, tag = 'scoped memory for tpu_custom_call.1']
    #allocation5 [shape = 'u8[65536]{0}', space=vmem, size = 0x10000, scoped, tag = 'input window, operand 1, single buffered']
    #allocation6 [shape = 's32[1]{0}', space=sflag, size = 0x4, scoped, tag = 'scoped memory for tpu_custom_call.1']
    #allocation7 [shape = 'u8[8192]{0}', space=vmem, size = 0x2000, scoped, tag = 'output window, operand 0, single buffered']
    %8 = vsyncpa [#allocation3], 0
    %9 = vsyncpa [#allocation6], 0
    %10 = vsyncpa [#allocation4], 0
    // Predicated region
    $region2: #{tpu_custom_call.1} parent=1 // pred_check
      _
    $region3: #{tpu_custom_call.1} parent=1 // pred_check_branch
      %12 = sbr.rel (0) target = $region5
    $region4: #{tpu_custom_call.1} parent=1 // pred_region
      %s14 = ssub.s32 256, 256
      %15 = vsyncadd [#allocation3], %s14
      %s16 = sshll.u32 [#allocation2], 4
      %s17 = int_to_ptr.vmem [resolvable:$true] %s16
      %22 = dma.hbm_to_vmem [thread:$0]  %s0, 256, %s17, [#allocation3], 128, 128, 8
    $region5: #{tpu_custom_call.1} parent=1 // pred_fallthru
      _
    // Predicated region
    $region6: #{tpu_custom_call.1} parent=1 // pred_check
      _
    $region7: #{tpu_custom_call.1} parent=1 // pred_check_branch
      %24 = sbr.rel (0) target = $region9
    $region8: #{tpu_custom_call.1} parent=1 // pred_region
      %s26 = ssub.s32 2048, 2048
      %27 = vsyncadd [#allocation6], %s26
      %s28 = sshll.u32 [#allocation5], 4
      %s29 = int_to_ptr.vmem [resolvable:$true] %s28
      %34 = dma.hbm_to_vmem [thread:$0]  %s1, 2048, %s29, [#allocation6], 128, 128, 8
    $region9: #{tpu_custom_call.1} parent=1 // pred_fallthru
      _
    // Predicated region
    $region10: #{tpu_custom_call.1} parent=1 // pred_check
      _
    $region11: #{tpu_custom_call.1} parent=1 // pred_check_branch
      %36 = sbr.rel (0) target = $region13
    $region12: #{tpu_custom_call.1} parent=1 // pred_region
      _
    $region13: #{tpu_custom_call.1} parent=1 // pred_fallthru
      _
    // Predicated region
    $region14: #{tpu_custom_call.1} parent=1 // pred_check
      _
    $region15: #{tpu_custom_call.1} parent=1 // pred_check_branch
      %38 = sbr.rel (0) target = $region17
    $region16: #{tpu_custom_call.1} parent=1 // pred_region
      %39 = dma.done [#allocation3], 256
    $region17: #{tpu_custom_call.1} parent=1 // pred_fallthru
      _
    // Predicated region
    $region18: #{tpu_custom_call.1} parent=1 // pred_check
      _
    $region19: #{tpu_custom_call.1} parent=1 // pred_check_branch
      %41 = sbr.rel (0) target = $region21
    $region20: #{tpu_custom_call.1} parent=1 // pred_region
      %42 = dma.done [#allocation6], 2048
    $region21: #{tpu_custom_call.1} parent=1 // pred_fallthru
      _
    %v43 = vld [vmem:[#allocation2] sm:$0xff]
    %v44 = vld [vmem:[#allocation2 + $0x8] sm:$0xff]
    %v45 = vld [vmem:[#allocation5] sm:$0xff]
    %v46 = vld [vmem:[#allocation5 + $0x8] sm:$0xff]
    %v47 = vld [vmem:[#allocation5 + $0x10] sm:$0xff]
    %v48 = vld [vmem:[#allocation5 + $0x18] sm:$0xff]
    %v49 = vld [vmem:[#allocation5 + $0x20] sm:$0xff]
    %v50 = vld [vmem:[#allocation5 + $0x28] sm:$0xff]
    %v51 = vld [vmem:[#allocation5 + $0x30] sm:$0xff]
    %v52 = vld [vmem:[#allocation5 + $0x38] sm:$0xff]
    %v53 = vld [vmem:[#allocation5 + $0x40] sm:$0xff]
    %v54 = vld [vmem:[#allocation5 + $0x48] sm:$0xff]
    %v55 = vld [vmem:[#allocation5 + $0x50] sm:$0xff]
    %v56 = vld [vmem:[#allocation5 + $0x58] sm:$0xff]
    %v57 = vld [vmem:[#allocation5 + $0x60] sm:$0xff]
    %v58 = vld [vmem:[#allocation5 + $0x68] sm:$0xff]
    %v59 = vld [vmem:[#allocation5 + $0x70] sm:$0xff]
    %v60 = vld [vmem:[#allocation5 + $0x78] sm:$0xff]
    %61 = vmatprep.subr.mxu0 0.0
    %62 = vmatpush1.msra.mxu0 %v45
    %63 = vmatprep.subr.mxu0 0.0
    %64 = vmatpush1.msra.mxu0 %v46
    %65 = vmatprep.subr.mxu0 0.0
    %66 = vmatpush1.msra.mxu0 %v47
    %67 = vmatprep.subr.mxu0 0.0
    %68 = vmatpush1.msra.mxu0 %v48
    %69 = vmatprep.subr.mxu0 0.0
    %70 = vmatpush1.msra.mxu0 %v49
    %71 = vmatprep.subr.mxu0 0.0
    %72 = vmatpush1.msra.mxu0 %v50
    %73 = vmatprep.subr.mxu0 0.0
    %74 = vmatpush1.msra.mxu0 %v51
    %75 = vmatprep.subr.mxu0 0.0
    %76 = vmatpush1.msra.mxu0 %v52
    %77 = vmatprep.subr.mxu0 0.0
    %78 = vmatpush1.msra.mxu0 %v53
    %79 = vmatprep.subr.mxu0 0.0
    %80 = vmatpush1.msra.mxu0 %v54
    %81 = vmatprep.subr.mxu0 0.0
    %82 = vmatpush1.msra.mxu0 %v55
    %83 = vmatprep.subr.mxu0 0.0
    %84 = vmatpush1.msra.mxu0 %v56
    %85 = vmatprep.subr.mxu0 0.0
    %86 = vmatpush1.msra.mxu0 %v57
    %87 = vmatprep.subr.mxu0 0.0
    %88 = vmatpush1.msra.mxu0 %v58
    %89 = vmatprep.subr.mxu0 0.0
    %90 = vmatpush1.msra.mxu0 %v59
    %91 = vmatprep.subr.mxu0 0.0
    %92 = vmatpush1.msra.mxu0 %v60
    %93 = vmatprep.subr.mxu0 0.0
    %94 = vmatpush1.msra.mxu0 0.0
    %95 = vmatprep.subr.mxu0 0.0
    %96 = vmatpush1.msra.mxu0 0.0
    %97 = vmatprep.subr.mxu0 0.0
    %98 = vmatpush1.msra.mxu0 0.0
    %99 = vmatprep.subr.mxu0 0.0
    %100 = vmatpush1.msra.mxu0 0.0
    %101 = vmatprep.subr.mxu0 0.0
    %102 = vmatpush1.msra.mxu0 0.0
    %103 = vmatprep.subr.mxu0 0.0
    %104 = vmatpush1.msra.mxu0 0.0
    %105 = vmatprep.subr.mxu0 0.0
    %106 = vmatpush1.msra.mxu0 0.0
    %107 = vmatprep.subr.mxu0 0.0
    %108 = vmatpush1.msra.mxu0 0.0
    %109 = vmatprep.subr.mxu0 0.0
    %110 = vmatpush1.msra.mxu0 0.0
    %111 = vmatprep.subr.mxu0 0.0
    %112 = vmatpush1.msra.mxu0 0.0
    %113 = vmatprep.subr.mxu0 0.0
    %114 = vmatpush1.msra.mxu0 0.0
    %115 = vmatprep.subr.mxu0 0.0
    %116 = vmatpush1.msra.mxu0 0.0
    %117 = vmatprep.subr.mxu0 0.0
    %118 = vmatpush1.msra.mxu0 0.0
    %119 = vmatprep.subr.mxu0 0.0
    %120 = vmatpush1.msra.mxu0 0.0
    %121 = vmatprep.subr.mxu0 0.0
    %122 = vmatpush1.msra.mxu0 0.0
    %123 = vmatprep.subr.mxu0 0.0
    %124 = vmatpush1.msra.mxu0 0.0
    %125 = vmatprep.mubr.f32.mxu0 0.0
    %126 = vmatmul.mubr.f32.gmra.mrb[0].mxu0 %v43
    %v127 = vpop.f32.mrb[0].mxu0
    %v128 = vadd.f32 0.0, %v127
    %v129 = vpop.f32.mrb[0].mxu0
    %130 = vmatprep.mubr.f32.mxu0 0.0
    %131 = vmatmul.mubr.f32.gmra.mrb[0].mxu0 %v44
    %v132 = vpop.f32.mrb[0].mxu0
    %v133 = vadd.f32 0.0, %v132
    %v134 = vpop.f32.mrb[0].mxu0
    %135 = vdwg.mxu0
    %v136 = vadd.f32 %v43, %v128
    %v137 = vadd.f32 %v44, %v133
    %v138 = vld [vmem:[%s2] sm:$0x1]
    %v140 = vlaneseq
    %v141 = vshrl.u32 %v140, 7
    %v142 = vsub.s32 0, %v141
    %v143 = vrot.slane %v138, %v142
    %v145 = vadd.f32 %v136, %v143
    %v146 = vadd.f32 %v137, %v143
    %147 = vst [vmem:[#allocation7] sm:$0xff] %v145
    %148 = vst [vmem:[#allocation7 + $0x8] sm:$0xff] %v146
    // Predicated region
    $region22: #{tpu_custom_call.1} parent=1 // pred_check
      _
    $region23: #{tpu_custom_call.1} parent=1 // pred_check_branch
      %150 = sbr.rel (0) target = $region25
    $region24: #{tpu_custom_call.1} parent=1 // pred_region
      %s152 = ssub.s32 256, 256
      %153 = vsyncadd [#allocation4], %s152
      %s154 = sshll.u32 [#allocation7], 4
      %s155 = int_to_ptr.vmem [resolvable:$true] %s154
      %160 = dma.vmem_to_hbm [thread:$0]  %s155, 256, %s3, [#allocation4], 128, 128, 8
    $region25: #{tpu_custom_call.1} parent=1 // pred_fallthru
      _
    // Predicated region
    $region26: #{tpu_custom_call.1} parent=1 // pred_check
      _
    $region27: #{tpu_custom_call.1} parent=1 // pred_check_branch
      %162 = sbr.rel (0) target = $region29
    $region28: #{tpu_custom_call.1} parent=1 // pred_region
      %163 = dma.done [#allocation4], 256
    $region29: #{tpu_custom_call.1} parent=1 // pred_fallthru
      _
    %164 = vsyncpa [#allocation3], 1
    %165 = vsyncpa [#allocation6], 1
    %166 = vsyncpa [#allocation4], 1

</llo_original>
